<compile_context>
chip_gen: v5e
topology: v5e:2x2
jax: 0.10.0
libtpu: 0.0.40
codegen_flags: <defaults>
</compile_context>

<pallas_src>
import functools

import jax
import jax.numpy as jnp
from jax.experimental import pallas as pl
from jax.experimental.pallas import tpu as pltpu


def _round_up(a, m):
    return ((a + m - 1) // m) * m


def _se_kernel(x_ref, w1t_ref, w2t_ref, o_ref, *, inv_hw, channels_last):
    """One grid step.

    channels_last=False: x_ref/o_ref are (Bb, C, HW)  (C on sublanes, HW on lanes)
    channels_last=True : x_ref/o_ref are (Bb, HW, C)  (HW on sublanes, C on lanes)
    w1t_ref: (C, Cr)   fc1 weight, pre-transposed
    w2t_ref: (Cr, C)   fc2 weight, pre-transposed
    """
    spatial_axis = 1 if channels_last else 2

    # Squeeze: global average pool over spatial, accumulated in f32.
    y = jnp.sum(x_ref[...], axis=spatial_axis, dtype=jnp.float32) * inv_hw  # (Bb, C)

    # Excite: two tiny batched FCs on the MXU.
    h = jnp.maximum(
        jnp.dot(y, w1t_ref[...], preferred_element_type=jnp.float32), 0.0)   # (Bb, Cr)
    s = jax.nn.sigmoid(
        jnp.dot(h, w2t_ref[...], preferred_element_type=jnp.float32))        # (Bb, C)

    # Gate dtype: keep I/O dtype for >= 16-bit floats (sigmoid output is in
    # [0,1]); stay in f32 for sub-bf16 activation dtypes and cast at the store.
    gate_dtype = x_ref.dtype if jnp.dtype(x_ref.dtype).itemsize >= 2 else jnp.float32
    s = s.astype(gate_dtype)

    # Scale: explicit second VMEM pass over the tile.
    if channels_last:
        o_ref[...] = (x_ref[...] * s[:, None, :]).astype(o_ref.dtype)
    else:
        o_ref[...] = (x_ref[...] * s[:, :, None]).astype(o_ref.dtype)


def _pick_batch_block(batch, padded_tile_bytes_per_batch, budget_bytes):
    """Pick the batch block size Bb.

    * Double-buffered in + out tiles (4 * Bb * padded_tile) must fit the budget.
    * Prefer >= 2 grid steps and an even number of steps (v7x has 2 TensorCores;
      an odd grid gives a load imbalance).
    * No divisibility requirement: caller uses grid = cdiv(B, Bb).
    """
    bb_max = max(1, budget_bytes // max(1, 4 * padded_tile_bytes_per_batch))
    bb_max = min(bb_max, batch)
    steps = pl.cdiv(batch, bb_max)
    if batch > 1:
        steps = max(steps, 2)
        if steps % 2 and steps < batch:
            steps += 1
    return pl.cdiv(batch, steps)


def _vmem_sizing():
    """Generation-aware (tile_budget_bytes, vmem_limit_bytes)."""
    mib = 1024 * 1024
    try:
        cap = int(pltpu.get_tpu_info().vmem_capacity_bytes)
    except Exception:
        cap = 64 * mib  # if the query fails, assume the smallest VMEM (v7x-like)
    if cap >= 128 * mib:            # v5e / v6e: 128 MiB VMEM per core
        return 96 * mib, 112 * mib
    return 40 * mib, 54 * mib       # v7x: 64 MiB VMEM per core


def se_layer(x, w1, w2, *, channels_last=False, donate_x=False,
             tile_budget_bytes=None, vmem_limit_bytes=None):
    """SE forward.

    x : (B, C, H, W) if channels_last=False (PyTorch NCHW), else (B, H, W, C).
    w1: (C//r, C), w2: (C, C//r)   -- bias-free nn.Linear layout (out, in).
    """
    if channels_last:
        B, H, W, C = x.shape
    else:
        B, C, H, W = x.shape
    HW = H * W
    Cr = w1.shape[0]
    # The reference module uses bias=False for both Linear layers.
    assert w1.shape == (Cr, C) and w2.shape == (C, Cr)

    # Free, contiguous reshape only (never an HBM transpose).
    x_flat = x.reshape(B, HW, C) if channels_last else x.reshape(B, C, HW)
    w1t = w1.T                       # (C, Cr)  one-time, outside the kernel
    w2t = w2.T                       # (Cr, C)

    # Padding-aware per-batch VMEM tile size: physical tiles are rounded up to
    # (sublane, 128) -- sublane = 8 f32 / 16 bf16 / 32 int8.
    itemsize = jnp.dtype(x.dtype).itemsize
    sublane = 8 * max(1, 4 // itemsize)
    if channels_last:
        padded_tile = _round_up(HW, sublane) * _round_up(C, 128) * itemsize
    else:
        padded_tile = _round_up(C, sublane) * _round_up(HW, 128) * itemsize

    auto_budget, auto_limit = _vmem_sizing()
    if tile_budget_bytes is None:
        tile_budget_bytes = auto_budget
    if vmem_limit_bytes is None:
        vmem_limit_bytes = auto_limit

    bb = _pick_batch_block(B, padded_tile, tile_budget_bytes)
    grid = (pl.cdiv(B, bb),)

    x_block = (bb, HW, C) if channels_last else (bb, C, HW)

    kernel = functools.partial(_se_kernel, inv_hw=1.0 / HW,
                               channels_last=channels_last)

    # Purely HBM-bandwidth bound: ~2*B*C*HW bytes of traffic, negligible FLOPs.
    cost = pl.CostEstimate(
        flops=2 * B * C * HW + 4 * B * C * Cr,
        transcendentals=B * C,
        bytes_accessed=(2 * B * C * HW * itemsize
                        + 2 * C * Cr * jnp.dtype(w1.dtype).itemsize),
    )

    out_flat = pl.pallas_call(
        kernel,
        out_shape=jax.ShapeDtypeStruct(x_flat.shape, x.dtype),
        grid_spec=pltpu.PrefetchScalarGridSpec(
            num_scalar_prefetch=0,
            grid=grid,
            in_specs=[
                pl.BlockSpec(x_block, lambda b: (b, 0, 0)),    # x tile
                pl.BlockSpec((C, Cr), lambda b: (0, 0)),       # fc1^T (full)
                pl.BlockSpec((Cr, C), lambda b: (0, 0)),       # fc2^T (full)
            ],
            out_specs=pl.BlockSpec(x_block, lambda b: (b, 0, 0)),
        ),
        compiler_params=pltpu.CompilerParams(
            dimension_semantics=("parallel",),
            vmem_limit_bytes=vmem_limit_bytes,
        ),
        cost_estimate=cost,
        input_output_aliases={0: 0} if donate_x else {},
    )(x_flat, w1t, w2t)

    return out_flat.reshape(x.shape)


def se_layer_ref(x, w1, w2, *, channels_last=False):
    """Pure-JAX reference matching the PyTorch forward."""
    if channels_last:
        y = jnp.mean(x, axis=(1, 2))                 # (B, C)
    else:
        y = jnp.mean(x, axis=(2, 3))                 # (B, C)
    h = jnp.maximum(y @ w1.T, 0.0)                   # (B, C//r)
    s = jax.nn.sigmoid(h @ w2.T)                     # (B, C)
    if channels_last:
        return x * s[:, None, None, :]
    return x * s[:, :, None, None]


if __name__ == "__main__":
    key = jax.random.PRNGKey(0)
    kx, k1, k2, kx2, k3, k4 = jax.random.split(key, 6)
    reduction = 16

    # --- Test 1: NCHW layout (matches the PyTorch module) --------------------
    B, C, H, W = 2, 64, 8, 8
    Cr = C // reduction
    x = jax.random.normal(kx, (B, C, H, W), dtype=jnp.float32)
    w1 = jax.random.normal(k1, (Cr, C), dtype=jnp.float32) * 0.1   # (C//r, C)
    w2 = jax.random.normal(k2, (C, Cr), dtype=jnp.float32) * 0.1   # (C, C//r)

    out = jax.block_until_ready(se_layer(x, w1, w2))
    ref = se_layer_ref(x, w1, w2)
    assert jnp.allclose(out, ref, atol=1e-5, rtol=1e-5), "NCHW mismatch vs reference"

    # --- Test 2: channels-last (lane-dense) path + non-divisible batch -------
    B2, H2, W2, C2 = 3, 7, 7, 128
    Cr2 = C2 // reduction
    x2 = jax.random.normal(kx2, (B2, H2, W2, C2), dtype=jnp.float32)
    w1b = jax.random.normal(k3, (Cr2, C2), dtype=jnp.float32) * 0.05
    w2b = jax.random.normal(k4, (C2, Cr2), dtype=jnp.float32) * 0.05

    out2 = jax.block_until_ready(se_layer(x2, w1b, w2b, channels_last=True))
    ref2 = se_layer_ref(x2, w1b, w2b, channels_last=True)
    assert jnp.allclose(out2, ref2, atol=1e-5, rtol=1e-5), "NHWC mismatch vs reference"

    print("KERNEL_OK")
</pallas_src>

<mosaic_0001>
module attributes {stable_mosaic.version = 11 : i64} {
  func.func @_se_kernel(%arg0: i32, %arg1: memref<1x64x64xf32, #tpu.memory_space<vmem>>, %arg2: memref<64x4xf32, #tpu.memory_space<vmem>>, %arg3: memref<4x64xf32, #tpu.memory_space<vmem>>, %arg4: memref<1x64x64xf32, #tpu.memory_space<vmem>>) attributes {dimension_semantics = [#tpu.dimension_semantics<parallel>], iteration_bounds = array<i64: 2>, scalar_prefetch = 0 : i64, scratch_operands = 0 : i64, tpu.core_type = #tpu.core_type<tc>, window_params = [{transform_indices = @transform_0, window_bounds = array<i64: 1, 64, 64>}, {pipeline_mode = #tpu.pipeline_mode<synchronous>, transform_indices = @transform_1, window_bounds = array<i64: 64, 4>}, {pipeline_mode = #tpu.pipeline_mode<synchronous>, transform_indices = @transform_2, window_bounds = array<i64: 4, 64>}, {transform_indices = @transform_3, window_bounds = array<i64: 1, 64, 64>}]} {
    %c0 = arith.constant 0 : index
    %c0_0 = arith.constant 0 : index
    %c0_1 = arith.constant 0 : index
    %0 = vector.load %arg1[%c0, %c0_0, %c0_1] : memref<1x64x64xf32, #tpu.memory_space<vmem>>, vector<1x64x64xf32>
    %cst = arith.constant dense<0.000000e+00> : vector<1x64xf32>
    %1 = vector.multi_reduction <add>, %0, %cst [2] : vector<1x64x64xf32> to vector<1x64xf32>
    %cst_2 = arith.constant 1.562500e-02 : f32
    %2 = vector.broadcast %cst_2 : f32 to vector<1x64xf32>
    %3 = arith.mulf %1, %2 : vector<1x64xf32>
    %c0_3 = arith.constant 0 : index
    %c0_4 = arith.constant 0 : index
    %4 = vector.load %arg2[%c0_3, %c0_4] : memref<64x4xf32, #tpu.memory_space<vmem>>, vector<64x4xf32>
    %cst_5 = arith.constant dense<0.000000e+00> : vector<1x4xf32>
    %5 = tpu.matmul %3, %4, %cst_5 {dimension_numbers = #tpu.dot_dimension_numbers<[1], [0], [0], [1], [0, 0, 1, 1], [], []>} : vector<1x64xf32>, vector<64x4xf32>, vector<1x4xf32> -> vector<1x4xf32>
    %cst_6 = arith.constant 0.000000e+00 : f32
    %6 = vector.broadcast %cst_6 : f32 to vector<1x4xf32>
    %7 = arith.maximumf %5, %6 : vector<1x4xf32>
    %c0_7 = arith.constant 0 : index
    %c0_8 = arith.constant 0 : index
    %8 = vector.load %arg3[%c0_7, %c0_8] : memref<4x64xf32, #tpu.memory_space<vmem>>, vector<4x64xf32>
    %cst_9 = arith.constant dense<0.000000e+00> : vector<1x64xf32>
    %9 = tpu.matmul %7, %8, %cst_9 {dimension_numbers = #tpu.dot_dimension_numbers<[1], [0], [0], [1], [0, 0, 1, 1], [], []>} : vector<1x4xf32>, vector<4x64xf32>, vector<1x64xf32> -> vector<1x64xf32>
    %10 = arith.negf %9 : vector<1x64xf32>
    %11 = math.exp %10 : vector<1x64xf32>
    %cst_10 = arith.constant 1.000000e+00 : f32
    %12 = vector.broadcast %cst_10 : f32 to vector<1x64xf32>
    %13 = arith.addf %12, %11 : vector<1x64xf32>
    %14 = arith.divf %12, %13 : vector<1x64xf32>
    %c0_11 = arith.constant 0 : index
    %c0_12 = arith.constant 0 : index
    %c0_13 = arith.constant 0 : index
    %15 = vector.load %arg1[%c0_11, %c0_12, %c0_13] : memref<1x64x64xf32, #tpu.memory_space<vmem>>, vector<1x64x64xf32>
    %16 = vector.shape_cast %14 : vector<1x64xf32> to vector<1x64x1xf32>
    %17 = vector.broadcast %16 : vector<1x64x1xf32> to vector<1x64x64xf32>
    %18 = arith.mulf %15, %17 : vector<1x64x64xf32>
    %c0_14 = arith.constant 0 : index
    %c0_15 = arith.constant 0 : index
    %c0_16 = arith.constant 0 : index
    %19 = vector.load %arg4[%c0_14, %c0_15, %c0_16] : memref<1x64x64xf32, #tpu.memory_space<vmem>>, vector<1x64x64xf32>
    tpu.vector_store %arg4[%c0_14, %c0_15, %c0_16], %18 {strides = array<i32>} : memref<1x64x64xf32, #tpu.memory_space<vmem>>, vector<1x64x64xf32>,
    return
  }
  func.func @transform_0(%arg0: i32) -> (i32, i32, i32) {
    %c0_i32 = arith.constant 0 : i32
    %c0_i32_0 = arith.constant 0 : i32
    %c0_i32_1 = arith.constant 0 : i32
    return %arg0, %c0_i32, %c0_i32_0 : i32, i32, i32
  }
  func.func @transform_1(%arg0: i32) -> (i32, i32) {
    %c0_i32 = arith.constant 0 : i32
    %c0_i32_0 = arith.constant 0 : i32
    %c0_i32_1 = arith.constant 0 : i32
    return %c0_i32, %c0_i32_0 : i32, i32
  }
  func.func @transform_2(%arg0: i32) -> (i32, i32) {
    %c0_i32 = arith.constant 0 : i32
    %c0_i32_0 = arith.constant 0 : i32
    %c0_i32_1 = arith.constant 0 : i32
    return %c0_i32, %c0_i32_0 : i32, i32
  }
  func.func @transform_3(%arg0: i32) -> (i32, i32, i32) {
    %c0_i32 = arith.constant 0 : i32
    %c0_i32_0 = arith.constant 0 : i32
    %c0_i32_1 = arith.constant 0 : i32
    return %arg0, %c0_i32, %c0_i32_0 : i32, i32, i32
  }
}

</mosaic_0001>

<llo_original>
// kernel: tpu_custom_call.1
$region0: #{tpu_custom_call.1}
  #allocation0 [shape = 'u32[]', space=smem, size = 0x4, offset = 0x4, fixed_abs, tag = 'smem constant byte address 0x4 - core index']
  #allocation1 [shape = 'u32[72,128]{1,0:T(1,128)}', space=vmem, size = 0x9000, scoped, tag = 'internal scratch']
  %s0 = inlined_call_operand.hbm [shape: f32[2,64,64], index: 0, kind: input, shape index: {}]
  %s1 = inlined_call_operand.vmem [shape: f32[64,4], index: 1, kind: input, shape index: {}]
  %s2 = inlined_call_operand.vmem [shape: f32[4,64], index: 2, kind: input, shape index: {}]
  %s3 = inlined_call_operand.hbm [shape: f32[2,64,64], index: 3, kind: output, shape index: {}]
  %s4 = sld [smem:[#allocation0]]
  $region49: #{tpu_custom_call.1} parent=0
    _
  %s6 = ssub.s32 1, %s4
  %s7 = scalar_select 0, %s6, %s4
  $region1: #{tpu_custom_call.1} parent=0
    #allocation2 [shape = 'u8[65536]{0}', space=vmem, size = 0x10000, scoped, tag = 'input window, operand 0']
    #allocation3 [shape = 's32[2]{0}', space=sflag, size = 0x8, scoped, tag = 'scoped memory for tpu_custom_call.1']
    #allocation4 [shape = 's32[2]{0}', space=sflag, size = 0x8, scoped, tag = 'scoped memory for tpu_custom_call.1']
    #allocation5 [shape = 'u8[65536]{0}', space=vmem, size = 0x10000, scoped, tag = 'output window, operand 0']
    %8 = vsyncpa [#allocation3], 0
    %s9 = scalar_lea.sflag [#allocation3], 1
    %10 = vsyncpa %s9, 0
    %11 = vsyncpa [#allocation4], 0
    %s12 = scalar_lea.sflag [#allocation4], 1
    %13 = vsyncpa %s12, 0
    loop: start=0, step=1, limit=4
    $region2: #{tpu_custom_call.1} parent=1 // loop_pre_header
      _
    $region3: #{tpu_custom_call.1} parent=1 // loop_header
      %s15 = sphi 0, %s19
      %p16 = scmp.ge.s32.totalorder %s15, 4
      %s25 = sphi 0, %s27
      %s28 = sphi 0, %s25
      %s29 = sphi 0, %s28
      %s45 = sphi 0, %s29
      %s49 = sphi 0, %s49
      %s51 = sphi 0, %s49
      %s52 = sphi 0, %s51
      %s66 = sphi 0, %s52
      %s70 = sphi 0, %s70
      %s72 = sphi 0, %s70
      %s73 = sphi 0, %s72
      %s87 = sphi 0, %s73
      %s93 = sphi 0, %s95
      %s96 = sphi 0, %s93
      %s97 = sphi 0, %s96
      %s113 = sphi 0, %s97
    $region4: #{tpu_custom_call.1} parent=1 // loop_header_branch
      %18 = sbr.rel (%p16) target = $region8
    $region5: #{tpu_custom_call.1} parent=1 // loop_body
      %s20 = ssub.s32 %s15, 1
      %s21 = ssub.s32 %s15, 2
      %s22 = sadd.s32 %s15, 1
      %s23 = ssub.s32 %s15, %s22
      %p24 = scmp.eq.s32.totalorder %s23, 0
      %s26 = sadd.s32 %s25, 1
      %s27 = scalar_select %p24, %s25, %s26
      %p30 = pneg %p24
      %p31 = scmp.eq.s32.totalorder %s15, 1
      %p32 = por %p30, %p31
      %p33 = scmp.ne.s32.totalorder %s25, %s28
      %p34 = scmp.eq.s32.totalorder %s15, 0
      %p35 = por %p33, %p34
      %p36 = scmp.ne.s32.totalorder %s25, %s28
      %p37 = scmp.eq.s32.totalorder %s20, 1
      %p38 = por %p36, %p37
      %p39 = scmp.ne.s32.totalorder %s28, %s29
      %p40 = scmp.eq.s32.totalorder %s20, 0
      %p41 = por %p39, %p40
      %p42 = scmp.ne.s32.totalorder %s28, %s29
      %p43 = scmp.eq.s32.totalorder %s21, 1
      %p44 = por %p42, %p43
      %p46 = scmp.ne.s32.totalorder %s29, %s45
      %p47 = scmp.eq.s32.totalorder %s21, 0
      %p48 = por %p46, %p47
      %s50 = sadd.s32 %s49, 1
      %p53 = scmp.eq.s32.totalorder %s15, 1
      %p54 = scmp.ne.s32.totalorder %s49, %s51
      %p55 = scmp.eq.s32.totalorder %s15, 0
      %p56 = por %p54, %p55
      %p57 = scmp.ne.s32.totalorder %s49, %s51
      %p58 = scmp.eq.s32.totalorder %s20, 1
      %p59 = por %p57, %p58
      %p60 = scmp.ne.s32.totalorder %s51, %s52
      %p61 = scmp.eq.s32.totalorder %s20, 0
      %p62 = por %p60, %p61
      %p63 = scmp.ne.s32.totalorder %s51, %s52
      %p64 = scmp.eq.s32.totalorder %s21, 1
      %p65 = por %p63, %p64
      %p67 = scmp.ne.s32.totalorder %s52, %s66
      %p68 = scmp.eq.s32.totalorder %s21, 0
      %p69 = por %p67, %p68
      %s71 = sadd.s32 %s70, 1
      %p74 = scmp.eq.s32.totalorder %s15, 1
      %p75 = scmp.ne.s32.totalorder %s70, %s72
      %p76 = scmp.eq.s32.totalorder %s15, 0
      %p77 = por %p75, %p76
      %p78 = scmp.ne.s32.totalorder %s70, %s72
      %p79 = scmp.eq.s32.totalorder %s20, 1
      %p80 = por %p78, %p79
      %p81 = scmp.ne.s32.totalorder %s72, %s73
      %p82 = scmp.eq.s32.totalorder %s20, 0
      %p83 = por %p81, %p82
      %p84 = scmp.ne.s32.totalorder %s72, %s73
      %p85 = scmp.eq.s32.totalorder %s21, 1
      %p86 = por %p84, %p85
      %p88 = scmp.ne.s32.totalorder %s73, %s87
      %p89 = scmp.eq.s32.totalorder %s21, 0
      %p90 = por %p88, %p89
      %s91 = ssub.s32 %s15, %s22
      %p92 = scmp.eq.s32.totalorder %s91, 0
      %s94 = sadd.s32 %s93, 1
      %s95 = scalar_select %p92, %s93, %s94
      %p98 = pneg %p92
      %p99 = scmp.eq.s32.totalorder %s15, 1
      %p100 = por %p98, %p99
      %p101 = scmp.ne.s32.totalorder %s93, %s96
      %p102 = scmp.eq.s32.totalorder %s15, 0
      %p103 = por %p101, %p102
      %p104 = scmp.ne.s32.totalorder %s93, %s96
      %p105 = scmp.eq.s32.totalorder %s20, 1
      %p106 = por %p104, %p105
      %p107 = scmp.ne.s32.totalorder %s96, %s97
      %p108 = scmp.eq.s32.totalorder %s20, 0
      %p109 = por %p107, %p108
      %p110 = scmp.ne.s32.totalorder %s96, %s97
      %p111 = scmp.eq.s32.totalorder %s21, 1
      %p112 = por %p110, %p111
      %p114 = scmp.ne.s32.totalorder %s97, %s113
      %p115 = scmp.eq.s32.totalorder %s21, 0
      %p116 = por %p114, %p115
      %p117 = scmp.le.s32.totalorder 1, %s15
      %p118 = scmp.lt.s32.totalorder %s15, 3
      %p119 = pnand %p117, %p118
      %p120 = pneg %p119
      // Predicated region
      $region9: #{tpu_custom_call.1} parent=5 // pred_check
        _
      $region10: #{tpu_custom_call.1} parent=5 // pred_check_branch
        %122 = sbr.rel (%p119) target = $region12
      $region11: #{tpu_custom_call.1} parent=5 // pred_region
        %s123 = ssub.s32 %s15, 1
        // Predicated region
        $region13: #{tpu_custom_call.1} parent=11 // pred_check
          %p124 = pneg %p62
        $region14: #{tpu_custom_call.1} parent=11 // pred_check_branch
          %126 = sbr.rel (%p124) target = $region16
        $region15: #{tpu_custom_call.1} parent=11 // pred_region
          _
        $region16: #{tpu_custom_call.1} parent=11 // pred_fallthru
          _
        // Predicated region
        $region17: #{tpu_custom_call.1} parent=11 // pred_check
          %p127 = pneg %p83
        $region18: #{tpu_custom_call.1} parent=11 // pred_check_branch
          %129 = sbr.rel (%p127) target = $region20
        $region19: #{tpu_custom_call.1} parent=11 // pred_region
          _
        $region20: #{tpu_custom_call.1} parent=11 // pred_fallthru
          _
      $region12: #{tpu_custom_call.1} parent=5 // pred_fallthru
        _
      %p130 = scmp.lt.s32.totalorder %s15, 2
      // Predicated region
      $region21: #{tpu_custom_call.1} parent=5 // pred_check
        %p131 = pneg %p130
      $region22: #{tpu_custom_call.1} parent=5 // pred_check_branch
        %133 = sbr.rel (%p131) target = $region24
      $region23: #{tpu_custom_call.1} parent=5 // pred_region
        // Predicated region
        $region25: #{tpu_custom_call.1} parent=23 // pred_check
          %p134 = pneg %p35
        $region26: #{tpu_custom_call.1} parent=23 // pred_check_branch
          %136 = sbr.rel (%p134) target = $region28
        $region27: #{tpu_custom_call.1} parent=23 // pred_region
          %s137 = sand.u32 %s25, 1
          %s138 = scalar_lea.sflag [#allocation3], %s137
          %s139 = sand.u32 %s25, 1
          %s140 = smul.addr %s139, 64
          %s141 = scalar_lea.vmem [#allocation2], %s140
          %143 = vsyncadd %s138, 0
          %s144 = smul.addr %s15, 8
          %s145 = smul.addr %s144, 8
          %s146 = scalar_lea.hbm %s0, %s145
          %s147 = sshll.u32 %s146, 4
          %s148 = int_to_ptr.hbm [resolvable:$true] %s147
          %s149 = sshll.u32 %s141, 4
          %s150 = int_to_ptr.vmem [resolvable:$true] %s149
          %155 = dma.hbm_to_vmem [thread:$0]  %s148, 1024, %s150, %s138, 128, 128, 8
        $region28: #{tpu_custom_call.1} parent=23 // pred_fallthru
          _
      $region24: #{tpu_custom_call.1} parent=5 // pred_fallthru
        _
      %p156 = scmp.le.s32.totalorder 1, %s15
      %p157 = scmp.lt.s32.totalorder %s15, 3
      %p158 = pnand %p156, %p157
      %p159 = pneg %p158
      // Predicated region
      $region29: #{tpu_custom_call.1} parent=5 // pred_check
        _
      $region30: #{tpu_custom_call.1} parent=5 // pred_check_branch
        %161 = sbr.rel (%p158) target = $region32
      $region31: #{tpu_custom_call.1} parent=5 // pred_region
        %s162 = ssub.s32 %s15, 1
        %s163 = sand.u32 %s28, 1
        %s164 = scalar_lea.sflag [#allocation3], %s163
        %s165 = sand.u32 %s28, 1
        %s166 = smul.addr %s165, 64
        %s167 = scalar_lea.vmem [#allocation2], %s166
        // Predicated region
        $region33: #{tpu_custom_call.1} parent=31 // pred_check
          %p168 = pneg %p41
        $region34: #{tpu_custom_call.1} parent=31 // pred_check_branch
          %170 = sbr.rel (%p168) target = $region36
        $region35: #{tpu_custom_call.1} parent=31 // pred_region
          %172 = dma.done %s164, 1024
        $region36: #{tpu_custom_call.1} parent=31 // pred_fallthru
          _
        %s173 = sand.u32 %s28, 1
        %s174 = scalar_lea.sflag [#allocation3], %s173
        %s175 = sand.u32 %s28, 1
        %s176 = smul.addr %s175, 64
        %s177 = scalar_lea.vmem [#allocation2], %s176
        %p178 = pneg %p41
        %p179 = pneg %p38
        %p180 = pneg %p62
        %p181 = pneg %p59
        %p182 = pneg %p83
        %p183 = pneg %p80
        %p184 = pneg %p109
        %p185 = pneg %p106
        %s186 = sand.u32 %s96, 1
        %s187 = scalar_lea.sflag [#allocation4], %s186
        %s188 = sand.u32 %s96, 1
        %s189 = smul.addr %s188, 64
        %s190 = scalar_lea.vmem [#allocation5], %s189
        %v191 = vld [vmem:[%s167] sm:$0xff]
        %v192 = vld [vmem:[%s167 + $0x8] sm:$0xff]
        %v193 = vld [vmem:[%s167 + $0x10] sm:$0xff]
        %v194 = vld [vmem:[%s167 + $0x18] sm:$0xff]
        %v195 = vld [vmem:[%s167 + $0x20] sm:$0xff]
        %v196 = vld [vmem:[%s167 + $0x28] sm:$0xff]
        %v197 = vld [vmem:[%s167 + $0x30] sm:$0xff]
        %v198 = vld [vmem:[%s167 + $0x38] sm:$0xff]
        %vm199 = vcmask 523264
        %v200 = vsel %vm199, %v191, 0.0
        %201 = vadd.xlane.f32.xlu0 %v200
        %v202 = vpop.xlane.xlu0 %201
        %v203 = vsel %vm199, %v192, 0.0
        %204 = vadd.xlane.f32.xlu0 %v203
        %v205 = vpop.xlane.xlu0 %204
        %v206 = vsel %vm199, %v193, 0.0
        %207 = vadd.xlane.f32.xlu0 %v206
        %v208 = vpop.xlane.xlu0 %207
        %v209 = vsel %vm199, %v194, 0.0
        %210 = vadd.xlane.f32.xlu0 %v209
        %v211 = vpop.xlane.xlu0 %210
        %v212 = vsel %vm199, %v195, 0.0
        %213 = vadd.xlane.f32.xlu0 %v212
        %v214 = vpop.xlane.xlu0 %213
        %v215 = vsel %vm199, %v196, 0.0
        %216 = vadd.xlane.f32.xlu0 %v215
        %v217 = vpop.xlane.xlu0 %216
        %v218 = vsel %vm199, %v197, 0.0
        %219 = vadd.xlane.f32.xlu0 %v218
        %v220 = vpop.xlane.xlu0 %219
        %v221 = vsel %vm199, %v198, 0.0
        %222 = vadd.xlane.f32.xlu0 %v221
        %v223 = vpop.xlane.xlu0 %222
        %v224 = vmul.f32 %v202, 0.015625
        %v225 = vmul.f32 %v205, 0.015625
        %v226 = vmul.f32 %v208, 0.015625
        %v227 = vmul.f32 %v211, 0.015625
        %v228 = vmul.f32 %v214, 0.015625
        %v229 = vmul.f32 %v217, 0.015625
        %v230 = vmul.f32 %v220, 0.015625
        %v231 = vmul.f32 %v223, 0.015625
        %v232 = vld [vmem:[%s1] sm:$0xff]
        %v233 = vld [vmem:[%s1 + $0x8] sm:$0xff]
        %v234 = vld [vmem:[%s1 + $0x10] sm:$0xff]
        %v235 = vld [vmem:[%s1 + $0x18] sm:$0xff]
        %v236 = vld [vmem:[%s1 + $0x20] sm:$0xff]
        %v237 = vld [vmem:[%s1 + $0x28] sm:$0xff]
        %v238 = vld [vmem:[%s1 + $0x30] sm:$0xff]
        %v239 = vld [vmem:[%s1 + $0x38] sm:$0xff]
        %v248 = vlaneseq
        %v249 = vand.u32 %v248, 127
        %v250 = vperm.slane %v224, %v249
        %v251 = vadd.s32 %v249, 4294967288
        %v252 = vperm.slane %v225, %v251
        %vm253 = vcmask 130112
        %v254 = vsel %vm253, %v252, %v250
        %v255 = vadd.s32 %v249, 4294967280
        %v256 = vperm.slane %v226, %v255
        %vm257 = vcmask 195712
        %v258 = vsel %vm257, %v256, %v254
        %v259 = vadd.s32 %v249, 4294967272
        %v260 = vperm.slane %v227, %v259
        %vm261 = vcmask 261312
        %v262 = vsel %vm261, %v260, %v258
        %v263 = vadd.s32 %v249, 4294967264
        %v264 = vperm.slane %v228, %v263
        %vm265 = vcmask 326912
        %v266 = vsel %vm265, %v264, %v262
        %v267 = vadd.s32 %v249, 4294967256
        %v268 = vperm.slane %v229, %v267
        %vm269 = vcmask 392512
        %v270 = vsel %vm269, %v268, %v266
        %v271 = vadd.s32 %v249, 4294967248
        %v272 = vperm.slane %v230, %v271
        %vm273 = vcmask 458112
        %v274 = vsel %vm273, %v272, %v270
        %v275 = vadd.s32 %v249, 4294967240
        %v276 = vperm.slane %v231, %v275
        %vm277 = vcmask 523712
        %v278 = vsel %vm277, %v276, %v274
        %v279 = vsel %vm199, %v278, 0
        %281 = vmatpush.msra.mxu0 0.0
        %282 = vmatpush.msra.mxu0 0.0
        %283 = vmatpush.msra.mxu0 0.0
        %284 = vmatpush.msra.mxu0 0.0
        %285 = vmatpush.msra.mxu0 0.0
        %286 = vmatpush.msra.mxu0 0.0
        %287 = vmatpush.msra.mxu0 0.0
        %288 = vmatpush.msra.mxu0 0.0
        %289 = vmatpush.msra.mxu0 %v239
        %290 = vmatpush.msra.mxu0 %v238
        %291 = vmatpush.msra.mxu0 %v237
        %292 = vmatpush.msra.mxu0 %v236
        %293 = vmatpush.msra.mxu0 %v235
        %294 = vmatpush.msra.mxu0 %v234
        %295 = vmatpush.msra.mxu0 %v233
        %296 = vmatpush.msra.mxu0 %v232
        %297 = vmatmul.f32.gmra.mxu0 %v279
        %v298 = vpop.f32.mrf.mxu0
        %v299 = vadd.f32 0.0, %v298
        %300 = vdwg.mxu0
        %v301 = vmax.f32 %v299, 0.0
        %v302 = vld [vmem:[%s2] sm:$0xf]
        %vm303 = vcmask 31744
        %v305 = vsel %vm303, %v301, 0
        %vm307 = vcmask 1043456
        %v309 = vsel %vm307, %v302, 0
        %311 = vmatpush.msra.mxu0 0.0
        %312 = vmatpush.msra.mxu0 0.0
        %313 = vmatpush.msra.mxu0 0.0
        %314 = vmatpush.msra.mxu0 0.0
        %315 = vmatpush.msra.mxu0 0.0
        %316 = vmatpush.msra.mxu0 0.0
        %317 = vmatpush.msra.mxu0 0.0
        %318 = vmatpush.msra.mxu0 0.0
        %319 = vmatpush.msra.mxu0 0.0
        %320 = vmatpush.msra.mxu0 0.0
        %321 = vmatpush.msra.mxu0 0.0
        %322 = vmatpush.msra.mxu0 0.0
        %323 = vmatpush.msra.mxu0 0.0
        %324 = vmatpush.msra.mxu0 0.0
        %325 = vmatpush.msra.mxu0 0.0
        %326 = vmatpush.msra.mxu0 %v309
        %327 = vmatmul.f32.gmra.mxu0 %v305
        %v328 = vpop.f32.mrf.mxu0
        %v329 = vadd.f32 0.0, %v328
        %330 = vdwg.mxu0
        %v331 = vxor.u32 %v329, 2147483648
        %v332 = vmul.f32 %v331, 1.442695
        %v333 = vpow.pop %v332
        %v334 = vadd.f32 %v333, 1.0
        %v335 = vrcp.pop %v334
        %v336 = vmul.f32 %v334, %v335
        %v337 = vsub.f32 1.0, %v336
        %v338 = vmul.f32 %v335, %v337
        %v339 = vadd.f32 %v335, %v338
        %vm340 = vweird.f32 %v334
        %vm341 = vweird.f32 %v335
        %vm342 = vmor %vm340, %vm341
        %v343 = vsel %vm342, %v335, %v339
        %v344 = vand.u32 2147483647, %v334
        %vm345 = vcmp.eq.f32.partialorder %v344, 8.507059e+37
        %v346 = vand.u32 %v334, 2147483648
        %v347 = vor.u32 1.1754944e-38, %v346
        %v348 = vsel %vm345, %v347, %v343
        %v349 = vmul.f32 1.0, %v348
        %v350 = vperm.slane %v349, 0
        %v351 = vlaneseq
        %v352 = vshrl.u32 %v351, 7
        %354 = vset.pattern.permute.xlu0 %v352
        %355 = vperm.xlu0 %354, %v350
        %v356 = vpop.permute.xlu0 %355
        %v357 = vlaneseq
        %v358 = vshrl.u32 %v357, 7
        %v359 = vadd.s32 %v358, 8
        %360 = vset.pattern.permute.xlu0 %v359
        %361 = vperm.xlu0 %360, %v350
        %v362 = vpop.permute.xlu0 %361
        %v363 = vlaneseq
        %v364 = vshrl.u32 %v363, 7
        %v365 = vadd.s32 %v364, 16
        %366 = vset.pattern.permute.xlu0 %v365
        %367 = vperm.xlu0 %366, %v350
        %v368 = vpop.permute.xlu0 %367
        %v369 = vlaneseq
        %v370 = vshrl.u32 %v369, 7
        %v371 = vadd.s32 %v370, 24
        %372 = vset.pattern.permute.xlu0 %v371
        %373 = vperm.xlu0 %372, %v350
        %v374 = vpop.permute.xlu0 %373
        %v375 = vlaneseq
        %v376 = vshrl.u32 %v375, 7
        %v377 = vadd.s32 %v376, 32
        %378 = vset.pattern.permute.xlu0 %v377
        %379 = vperm.xlu0 %378, %v350
        %v380 = vpop.permute.xlu0 %379
        %v381 = vlaneseq
        %v382 = vshrl.u32 %v381, 7
        %v383 = vadd.s32 %v382, 40
        %384 = vset.pattern.permute.xlu0 %v383
        %385 = vperm.xlu0 %384, %v350
        %v386 = vpop.permute.xlu0 %385
        %v387 = vlaneseq
        %v388 = vshrl.u32 %v387, 7
        %v389 = vadd.s32 %v388, 48
        %390 = vset.pattern.permute.xlu0 %v389
        %391 = vperm.xlu0 %390, %v350
        %v392 = vpop.permute.xlu0 %391
        %v393 = vlaneseq
        %v394 = vshrl.u32 %v393, 7
        %v395 = vadd.s32 %v394, 56
        %396 = vset.pattern.permute.xlu0 %v395
        %397 = vperm.xlu0 %396, %v350
        %v398 = vpop.permute.xlu0 %397
        %v399 = vmul.f32 %v191, %v356
        %v400 = vmul.f32 %v192, %v362
        %v401 = vmul.f32 %v193, %v368
        %v402 = vmul.f32 %v194, %v374
        %v403 = vmul.f32 %v195, %v380
        %v404 = vmul.f32 %v196, %v386
        %v405 = vmul.f32 %v197, %v392
        %v406 = vmul.f32 %v198, %v398
        %407 = vst.msk [vmem:[%s190] sm:$0xff] %vm199, %v399
        %408 = vst.msk [vmem:[%s190 + $0x8] sm:$0xff] %vm199, %v400
        %409 = vst.msk [vmem:[%s190 + $0x10] sm:$0xff] %vm199, %v401
        %410 = vst.msk [vmem:[%s190 + $0x18] sm:$0xff] %vm199, %v402
        %411 = vst.msk [vmem:[%s190 + $0x20] sm:$0xff] %vm199, %v403
        %412 = vst.msk [vmem:[%s190 + $0x28] sm:$0xff] %vm199, %v404
        %413 = vst.msk [vmem:[%s190 + $0x30] sm:$0xff] %vm199, %v405
        %414 = vst.msk [vmem:[%s190 + $0x38] sm:$0xff] %vm199, %v406
        %s415 = sand.u32 %s96, 1
        %s416 = scalar_lea.sflag [#allocation4], %s415
        %s417 = sand.u32 %s96, 1
        %s418 = smul.addr %s417, 64
        %s419 = scalar_lea.vmem [#allocation5], %s418
        // Predicated region
        $region37: #{tpu_custom_call.1} parent=31 // pred_check
          %p420 = pneg %p106
        $region38: #{tpu_custom_call.1} parent=31 // pred_check_branch
          %422 = sbr.rel (%p420) target = $region40
        $region39: #{tpu_custom_call.1} parent=31 // pred_region
          %424 = vsyncadd %s416, 0
          %s425 = smul.addr %s20, 8
          %s426 = smul.addr %s425, 8
          %s427 = scalar_lea.hbm %s3, %s426
          %s428 = sshll.u32 %s419, 4
          %s429 = int_to_ptr.vmem [resolvable:$true] %s428
          %s430 = sshll.u32 %s427, 4
          %s431 = int_to_ptr.hbm [resolvable:$true] %s430
          %436 = dma.vmem_to_hbm [thread:$0]  %s429, 1024, %s431, %s416, 128, 128, 8
        $region40: #{tpu_custom_call.1} parent=31 // pred_fallthru
          _
      $region32: #{tpu_custom_call.1} parent=5 // pred_fallthru
        _
      %p437 = scmp.le.s32.totalorder 2, %s15
      // Predicated region
      $region41: #{tpu_custom_call.1} parent=5 // pred_check
        %p438 = pneg %p437
      $region42: #{tpu_custom_call.1} parent=5 // pred_check_branch
        %440 = sbr.rel (%p438) target = $region44
      $region43: #{tpu_custom_call.1} parent=5 // pred_region
        %s441 = ssub.s32 %s15, 2
        // Predicated region
        $region45: #{tpu_custom_call.1} parent=43 // pred_check
          %p442 = pneg %p112
        $region46: #{tpu_custom_call.1} parent=43 // pred_check_branch
          %444 = sbr.rel (%p442) target = $region48
        $region47: #{tpu_custom_call.1} parent=43 // pred_region
          %s445 = sand.u32 %s97, 1
          %s446 = scalar_lea.sflag [#allocation4], %s445
          %s447 = sand.u32 %s97, 1
          %s448 = smul.addr %s447, 64
          %s449 = scalar_lea.vmem [#allocation5], %s448
          %451 = dma.done %s446, 1024
        $region48: #{tpu_custom_call.1} parent=43 // pred_fallthru
          _
      $region44: #{tpu_custom_call.1} parent=5 // pred_fallthru
        _
    $region6: #{tpu_custom_call.1} parent=1 // loop_footer
      %s19 = sadd.s32 1, %s15
    $region7: #{tpu_custom_call.1} parent=1 // loop_footer_branch
      %14 = sbr.rel target = $region3
    $region8: #{tpu_custom_call.1} parent=1 // loop_exit
      _
    %452 = vsyncpa [#allocation3], 1
    %s453 = scalar_lea.sflag [#allocation3], 1
    %454 = vsyncpa %s453, 1
    %455 = vsyncpa [#allocation4], 1
    %s456 = scalar_lea.sflag [#allocation4], 1
    %457 = vsyncpa %s456, 1

</llo_original>
